<compile_context>
chip_gen: v7x
topology: tpu7x:2x2x1
jax: 0.10.0
libtpu: 0.0.40
codegen_flags: <defaults>
</compile_context>

<pallas_src>
import jax
import jax.numpy as jnp
from jax import lax
from jax.experimental import pallas as pl
from jax.experimental.pallas import tpu as pltpu

# Small synthetic config (the original code pulls these from `ck`)
N_ACTION = 4                 # d_in1
N_STATE = 8                  # d_in2
D_H11 = 16
D_H12 = 16
D_H1 = D_H11 + D_H12         # 32
D_H2 = 32
D_OUT = 32

PACK = 4                     # batch rows packed per 128-lane row (4 * 32 = 128)
TILE_ROWS = 32768            # batch rows per grid step (tbp = 8192 packed rows)
CHUNK_ROWS_P = 512           # packed rows per in-kernel compute chunk
VMEM_LIMIT = 48 * 1024 * 1024  # fits v5e/v6e (128 MiB phys) and v7x (64 MiB/TC)


def prebelief_kernel(a_ref, o_ref, w1a_ref, w1o_ref, b1_ref,
                     w2_ref, b2_ref, w3_ref, b3_ref, out_ref):
    tbp = out_ref.shape[0]   # packed rows in this grid step (static)

    # Weights/biases are VMEM resident (constant index maps); load once per step.
    w1a = w1a_ref[...]
    w1o = w1o_ref[...]
    b1 = b1_ref[...]
    w2 = w2_ref[...]
    b2 = b2_ref[...]
    w3 = w3_ref[...]
    b3 = b3_ref[...]

    def compute(start, size):
        # Inputs arrive in caller dtype; cast to bf16 in-kernel (cheap VPU work,
        # hidden under DMA) so the MXU runs bf16 operands with f32 accumulation.
        a = a_ref[pl.ds(start, size), :].astype(jnp.bfloat16)
        o = o_ref[pl.ds(start, size), :].astype(jnp.bfloat16)

        # Fused branch1+branch2: the torch concat is just the two matmuls writing
        # disjoint lane ranges of the packed 128-wide hidden (zeros elsewhere).
        y1 = jnp.dot(a, w1a, preferred_element_type=jnp.float32)
        y1 = y1 + jnp.dot(o, w1o, preferred_element_type=jnp.float32)
        y1 = jnp.maximum(y1 + b1, 0.0)
        y1_bf = y1.astype(jnp.bfloat16)     # single bf16 copy: next dot + residual

        # Residual block: relu(y1 @ W2 + b2) + y1
        y2 = jnp.dot(y1_bf, w2, preferred_element_type=jnp.float32)
        y2 = jnp.maximum(y2 + b2, 0.0) + y1_bf.astype(jnp.float32)

        # Output head: relu(y2 @ W3 + b3)
        y3 = jnp.dot(y2.astype(jnp.bfloat16), w3, preferred_element_type=jnp.float32)
        out_ref[pl.ds(start, size), :] = jnp.maximum(y3 + b3, 0.0).astype(out_ref.dtype)

    # Chunk the compute so f32 intermediates stay ~1 MB regardless of how big the
    # DMA tile is (DMA granularity stays the full BlockSpec tile).
    n_full = tbp // CHUNK_ROWS_P
    tail = tbp - n_full * CHUNK_ROWS_P
    if n_full > 0:
        def loop_body(c, carry):
            compute(pl.multiple_of(c * CHUNK_ROWS_P, CHUNK_ROWS_P), CHUNK_ROWS_P)
            return carry
        lax.fori_loop(0, n_full, loop_body, 0)
    if tail > 0:
        compute(n_full * CHUNK_ROWS_P, tail)


def _round_up(x, m):
    return (x + m - 1) // m * m


def _block_diag_pack(w, n=PACK):
    """Replicate a (din, dout) weight n times on the block diagonal."""
    din, dout = w.shape
    out = jnp.zeros((n * din, n * dout), w.dtype)
    for i in range(n):
        out = out.at[i * din:(i + 1) * din, i * dout:(i + 1) * dout].set(w)
    return out


def pack_params(params):
    """Original (in, out) f32 params -> lane-packed bf16 weights, f32 biases.

    The two input branches stay separate (W1a for action, W1o for obs); each is
    block-diagonally replicated PACK times and writes its own lane range of the
    packed 128-wide hidden, so no concat is ever materialized.
    """
    w11, b11, w12, b12, w2, b2, w3, b3 = params

    w1a = jnp.zeros((PACK * N_ACTION, PACK * D_H1), jnp.float32)   # (16, 128)
    w1o = jnp.zeros((PACK * N_STATE, PACK * D_H1), jnp.float32)    # (32, 128)
    for i in range(PACK):
        w1a = w1a.at[i * N_ACTION:(i + 1) * N_ACTION,
                     i * D_H1:i * D_H1 + D_H11].set(w11)
        w1o = w1o.at[i * N_STATE:(i + 1) * N_STATE,
                     i * D_H1 + D_H11:(i + 1) * D_H1].set(w12)

    b1 = jnp.concatenate([b11, b12], axis=-1)                      # (1, 32)
    w2p = _block_diag_pack(w2)                                     # (128, 128)
    w3p = _block_diag_pack(w3)                                     # (128, 128)

    return (w1a.astype(jnp.bfloat16),
            w1o.astype(jnp.bfloat16),
            jnp.tile(b1, (1, PACK)).astype(jnp.float32),
            w2p.astype(jnp.bfloat16),
            jnp.tile(b2, (1, PACK)).astype(jnp.float32),
            w3p.astype(jnp.bfloat16),
            jnp.tile(b3, (1, PACK)).astype(jnp.float32))


def prebelief_forward(action, obs, packed_params, *, tile_rows=TILE_ROWS):
    """action: (B, N_ACTION), obs: (B, N_STATE) -> (B, D_OUT) bf16."""
    B = action.shape[0]
    w1a, w1o, b1p, w2p, b2p, w3p, b3p = packed_params

    # Grid/tile selection:
    #  * large B: big tiles (multiple MB per step) amortize the per-step overhead
    #  * grid >= 2 whenever B allows so ("parallel",) uses both v7x TensorCores
    min_tile = PACK * 16                     # 64 rows: bf16 output needs 16 sublanes
    if B >= 2 * min_tile:
        grid_n = max(pl.cdiv(B, tile_rows), 2)
    else:
        grid_n = 1
    tb = _round_up(pl.cdiv(B, grid_n), min_tile)   # batch rows per grid step
    bp = grid_n * tb
    tbp = tb // PACK

    if bp != B:
        pad = ((0, bp - B), (0, 0))
        action = jnp.pad(action, pad)
        obs = jnp.pad(obs, pad)

    # Lane packing: PACK consecutive batch rows -> one packed row (row-major
    # reshape only; no concat / dtype cast / extra activation pass wrapper-side).
    rows_p = bp // PACK
    a_p = action.reshape(rows_p, PACK * N_ACTION)
    o_p = obs.reshape(rows_p, PACK * N_STATE)

    # Executed (block-diag) FLOPs / bytes so XLA schedules around a mem-bound call.
    flops = 2 * (PACK * D_H1) * (PACK * (N_ACTION + N_STATE) + PACK * D_H1
                                 + PACK * D_H2) * rows_p
    act_bytes = rows_p * (PACK * N_ACTION * a_p.dtype.itemsize
                          + PACK * N_STATE * o_p.dtype.itemsize
                          + PACK * D_OUT * 2)
    param_bytes = sum(int(p.size) * p.dtype.itemsize for p in packed_params)
    cost = pl.CostEstimate(flops=int(flops), transcendentals=0,
                           bytes_accessed=int(act_bytes + param_bytes))

    const = lambda arr: pl.BlockSpec(arr.shape, lambda i: (0, 0))  # VMEM-resident

    out_packed = pl.pallas_call(
        prebelief_kernel,
        out_shape=jax.ShapeDtypeStruct((rows_p, PACK * D_OUT), jnp.bfloat16),
        grid=(grid_n,),
        in_specs=[
            pl.BlockSpec((tbp, PACK * N_ACTION), lambda i: (i, 0)),  # packed action
            pl.BlockSpec((tbp, PACK * N_STATE), lambda i: (i, 0)),   # packed obs
            const(w1a), const(w1o), const(b1p),
            const(w2p), const(b2p),
            const(w3p), const(b3p),
        ],
        out_specs=pl.BlockSpec((tbp, PACK * D_OUT), lambda i: (i, 0)),  # lane-dense
        compiler_params=pltpu.CompilerParams(
            dimension_semantics=("parallel",),   # megacore sharding on v7x
            vmem_limit_bytes=VMEM_LIMIT,
        ),
        cost_estimate=cost,
    )(a_p, o_p, w1a, w1o, b1p, w2p, b2p, w3p, b3p)

    # Unpack: inverse row-major reshape, then drop batch padding.
    return out_packed.reshape(bp, D_OUT)[:B]


def init_params(key):
    """Deterministic parameter init; weights stored as (in, out) for x @ W."""
    ks = jax.random.split(key, 8)

    def linear(kw, kb, d_in, d_out):
        bound = 1.0 / jnp.sqrt(d_in)
        w = jax.random.uniform(kw, (d_in, d_out), jnp.float32, -bound, bound)
        b = jax.random.uniform(kb, (1, d_out), jnp.float32, -bound, bound)
        return w, b

    w11, b11 = linear(ks[0], ks[1], N_ACTION, D_H11)
    w12, b12 = linear(ks[2], ks[3], N_STATE, D_H12)
    w2, b2 = linear(ks[4], ks[5], D_H1, D_H2)
    w3, b3 = linear(ks[6], ks[7], D_H2, D_OUT)
    return (w11, b11, w12, b12, w2, b2, w3, b3)


def reference_forward(action, obs, params):
    """Unfused reference matching the PyTorch forward (eval-mode dropout), using
    the same bf16 operand casts / f32 accumulation / single bf16 hidden copy the
    kernel uses, to validate the fusion + lane packing tightly."""
    w11, b11, w12, b12, w2, b2, w3, b3 = params
    bf = lambda a: a.astype(jnp.bfloat16)
    dot = lambda a, w: jnp.dot(bf(a), bf(w), preferred_element_type=jnp.float32)
    h1 = jnp.maximum(dot(action, w11) + b11, 0.0)
    h2 = jnp.maximum(dot(obs, w12) + b12, 0.0)
    y = jnp.concatenate([h1, h2], axis=-1)
    y_bf = bf(y)
    y = jnp.maximum(dot(y_bf, w2) + b2, 0.0) + y_bf.astype(jnp.float32)
    return jnp.maximum(dot(y, w3) + b3, 0.0)


if __name__ == "__main__":
    key = jax.random.PRNGKey(0)
    k_act, k_obs, k_param, k_act2, k_obs2 = jax.random.split(key, 5)

    params = init_params(k_param)
    packed = pack_params(params)

    # Small-shape smoke test (B=8; grid=1, tail-only compute path, batch padding).
    B = 8
    action = jax.random.normal(k_act, (B, N_ACTION), jnp.float32)
    obs = jax.random.normal(k_obs, (B, N_STATE), jnp.float32)
    out = prebelief_forward(action, obs, packed)
    jax.block_until_ready(out)
    ref = reference_forward(action, obs, params)
    assert out.shape == (B, D_OUT)
    assert jnp.allclose(out.astype(jnp.float32), ref, atol=2e-2, rtol=2e-2)

    # Exercise the multi-step grid + in-kernel chunk loop (grid=2, tbp=576:
    # one full 512-row chunk plus a 64-row tail per step).
    B2 = 4608
    action2 = jax.random.normal(k_act2, (B2, N_ACTION), jnp.float32)
    obs2 = jax.random.normal(k_obs2, (B2, N_STATE), jnp.float32)
    out2 = prebelief_forward(action2, obs2, packed)
    jax.block_until_ready(out2)
    ref2 = reference_forward(action2, obs2, params)
    assert out2.shape == (B2, D_OUT)
    assert jnp.allclose(out2.astype(jnp.float32), ref2, atol=2e-2, rtol=2e-2)

    print("KERNEL_OK")
</pallas_src>

<mosaic_0001>
module attributes {stable_mosaic.version = 11 : i64} {
  func.func @prebelief_kernel(%arg0: i32, %arg1: memref<16x16xf32, #tpu.memory_space<vmem>>, %arg2: memref<16x32xf32, #tpu.memory_space<vmem>>, %arg3: memref<16x128xbf16, #tpu.memory_space<vmem>>, %arg4: memref<32x128xbf16, #tpu.memory_space<vmem>>, %arg5: memref<1x128xf32, #tpu.memory_space<vmem>>, %arg6: memref<128x128xbf16, #tpu.memory_space<vmem>>, %arg7: memref<1x128xf32, #tpu.memory_space<vmem>>, %arg8: memref<128x128xbf16, #tpu.memory_space<vmem>>, %arg9: memref<1x128xf32, #tpu.memory_space<vmem>>, %arg10: memref<16x128xbf16, #tpu.memory_space<vmem>>) attributes {dimension_semantics = [#tpu.dimension_semantics<parallel>], iteration_bounds = array<i64: 1>, scalar_prefetch = 0 : i64, scratch_operands = 0 : i64, tpu.core_type = #tpu.core_type<tc>, window_params = [{transform_indices = @transform_0, window_bounds = array<i64: 16, 16>}, {transform_indices = @transform_1, window_bounds = array<i64: 16, 32>}, {pipeline_mode = #tpu.pipeline_mode<synchronous>, transform_indices = @transform_2, window_bounds = array<i64: 16, 128>}, {pipeline_mode = #tpu.pipeline_mode<synchronous>, transform_indices = @transform_3, window_bounds = array<i64: 32, 128>}, {pipeline_mode = #tpu.pipeline_mode<synchronous>, transform_indices = @transform_4, window_bounds = array<i64: 1, 128>}, {pipeline_mode = #tpu.pipeline_mode<synchronous>, transform_indices = @transform_5, window_bounds = array<i64: 128, 128>}, {pipeline_mode = #tpu.pipeline_mode<synchronous>, transform_indices = @transform_6, window_bounds = array<i64: 1, 128>}, {pipeline_mode = #tpu.pipeline_mode<synchronous>, transform_indices = @transform_7, window_bounds = array<i64: 128, 128>}, {pipeline_mode = #tpu.pipeline_mode<synchronous>, transform_indices = @transform_8, window_bounds = array<i64: 1, 128>}, {transform_indices = @transform_9, window_bounds = array<i64: 16, 128>}]} {
    %c0 = arith.constant 0 : index
    %c0_0 = arith.constant 0 : index
    %0 = vector.load %arg3[%c0, %c0_0] : memref<16x128xbf16, #tpu.memory_space<vmem>>, vector<16x128xbf16>
    %c0_1 = arith.constant 0 : index
    %c0_2 = arith.constant 0 : index
    %1 = vector.load %arg4[%c0_1, %c0_2] : memref<32x128xbf16, #tpu.memory_space<vmem>>, vector<32x128xbf16>
    %c0_3 = arith.constant 0 : index
    %c0_4 = arith.constant 0 : index
    %2 = vector.load %arg5[%c0_3, %c0_4] : memref<1x128xf32, #tpu.memory_space<vmem>>, vector<1x128xf32>
    %c0_5 = arith.constant 0 : index
    %c0_6 = arith.constant 0 : index
    %3 = vector.load %arg6[%c0_5, %c0_6] : memref<128x128xbf16, #tpu.memory_space<vmem>>, vector<128x128xbf16>
    %c0_7 = arith.constant 0 : index
    %c0_8 = arith.constant 0 : index
    %4 = vector.load %arg7[%c0_7, %c0_8] : memref<1x128xf32, #tpu.memory_space<vmem>>, vector<1x128xf32>
    %c0_9 = arith.constant 0 : index
    %c0_10 = arith.constant 0 : index
    %5 = vector.load %arg8[%c0_9, %c0_10] : memref<128x128xbf16, #tpu.memory_space<vmem>>, vector<128x128xbf16>
    %c0_11 = arith.constant 0 : index
    %c0_12 = arith.constant 0 : index
    %6 = vector.load %arg9[%c0_11, %c0_12] : memref<1x128xf32, #tpu.memory_space<vmem>>, vector<1x128xf32>
    %c0_13 = arith.constant 0 : index
    %c0_14 = arith.constant 0 : index
    %7 = vector.load %arg1[%c0_13, %c0_14] : memref<16x16xf32, #tpu.memory_space<vmem>>, vector<16x16xf32>
    %8 = arith.truncf %7 : vector<16x16xf32> to vector<16x16xbf16>
    %c0_15 = arith.constant 0 : index
    %c0_16 = arith.constant 0 : index
    %9 = vector.load %arg2[%c0_15, %c0_16] : memref<16x32xf32, #tpu.memory_space<vmem>>, vector<16x32xf32>
    %10 = arith.truncf %9 : vector<16x32xf32> to vector<16x32xbf16>
    %cst = arith.constant dense<0.000000e+00> : vector<16x128xf32>
    %11 = tpu.matmul %8, %0, %cst {dimension_numbers = #tpu.dot_dimension_numbers<[1], [0], [0], [1], [0, 0, 1, 1], [], []>} : vector<16x16xbf16>, vector<16x128xbf16>, vector<16x128xf32> -> vector<16x128xf32>
    %cst_17 = arith.constant dense<0.000000e+00> : vector<16x128xf32>
    %12 = tpu.matmul %10, %1, %cst_17 {dimension_numbers = #tpu.dot_dimension_numbers<[1], [0], [0], [1], [0, 0, 1, 1], [], []>} : vector<16x32xbf16>, vector<32x128xbf16>, vector<16x128xf32> -> vector<16x128xf32>
    %13 = arith.addf %11, %12 : vector<16x128xf32>
    %14 = vector.broadcast %2 : vector<1x128xf32> to vector<16x128xf32>
    %15 = arith.addf %13, %14 : vector<16x128xf32>
    %cst_18 = arith.constant 0.000000e+00 : f32
    %16 = vector.broadcast %cst_18 : f32 to vector<16x128xf32>
    %17 = arith.maximumf %15, %16 : vector<16x128xf32>
    %18 = arith.truncf %17 : vector<16x128xf32> to vector<16x128xbf16>
    %cst_19 = arith.constant dense<0.000000e+00> : vector<16x128xf32>
    %19 = tpu.matmul %18, %3, %cst_19 {dimension_numbers = #tpu.dot_dimension_numbers<[1], [0], [0], [1], [0, 0, 1, 1], [], []>} : vector<16x128xbf16>, vector<128x128xbf16>, vector<16x128xf32> -> vector<16x128xf32>
    %20 = vector.broadcast %4 : vector<1x128xf32> to vector<16x128xf32>
    %21 = arith.addf %19, %20 : vector<16x128xf32>
    %cst_20 = arith.constant 0.000000e+00 : f32
    %22 = vector.broadcast %cst_20 : f32 to vector<16x128xf32>
    %23 = arith.maximumf %21, %22 : vector<16x128xf32>
    %24 = arith.extf %18 : vector<16x128xbf16> to vector<16x128xf32>
    %25 = arith.addf %23, %24 : vector<16x128xf32>
    %26 = arith.truncf %25 : vector<16x128xf32> to vector<16x128xbf16>
    %cst_21 = arith.constant dense<0.000000e+00> : vector<16x128xf32>
    %27 = tpu.matmul %26, %5, %cst_21 {dimension_numbers = #tpu.dot_dimension_numbers<[1], [0], [0], [1], [0, 0, 1, 1], [], []>} : vector<16x128xbf16>, vector<128x128xbf16>, vector<16x128xf32> -> vector<16x128xf32>
    %28 = vector.broadcast %6 : vector<1x128xf32> to vector<16x128xf32>
    %29 = arith.addf %27, %28 : vector<16x128xf32>
    %cst_22 = arith.constant 0.000000e+00 : f32
    %30 = vector.broadcast %cst_22 : f32 to vector<16x128xf32>
    %31 = arith.maximumf %29, %30 : vector<16x128xf32>
    %32 = arith.truncf %31 : vector<16x128xf32> to vector<16x128xbf16>
    %c0_23 = arith.constant 0 : index
    %c0_24 = arith.constant 0 : index
    %33 = vector.load %arg10[%c0_23, %c0_24] : memref<16x128xbf16, #tpu.memory_space<vmem>>, vector<16x128xbf16>
    tpu.vector_store %arg10[%c0_23, %c0_24], %32 {strides = array<i32>} : memref<16x128xbf16, #tpu.memory_space<vmem>>, vector<16x128xbf16>,
    return
  }
  func.func @transform_0(%arg0: i32) -> (i32, i32) {
    %c0_i32 = arith.constant 0 : i32
    %c0_i32_0 = arith.constant 0 : i32
    return %arg0, %c0_i32 : i32, i32
  }
  func.func @transform_1(%arg0: i32) -> (i32, i32) {
    %c0_i32 = arith.constant 0 : i32
    %c0_i32_0 = arith.constant 0 : i32
    return %arg0, %c0_i32 : i32, i32
  }
  func.func @transform_2(%arg0: i32) -> (i32, i32) {
    %c0_i32 = arith.constant 0 : i32
    %c0_i32_0 = arith.constant 0 : i32
    %c0_i32_1 = arith.constant 0 : i32
    return %c0_i32, %c0_i32_0 : i32, i32
  }
  func.func @transform_3(%arg0: i32) -> (i32, i32) {
    %c0_i32 = arith.constant 0 : i32
    %c0_i32_0 = arith.constant 0 : i32
    %c0_i32_1 = arith.constant 0 : i32
    return %c0_i32, %c0_i32_0 : i32, i32
  }
  func.func @transform_4(%arg0: i32) -> (i32, i32) {
    %c0_i32 = arith.constant 0 : i32
    %c0_i32_0 = arith.constant 0 : i32
    %c0_i32_1 = arith.constant 0 : i32
    return %c0_i32, %c0_i32_0 : i32, i32
  }
  func.func @transform_5(%arg0: i32) -> (i32, i32) {
    %c0_i32 = arith.constant 0 : i32
    %c0_i32_0 = arith.constant 0 : i32
    %c0_i32_1 = arith.constant 0 : i32
    return %c0_i32, %c0_i32_0 : i32, i32
  }
  func.func @transform_6(%arg0: i32) -> (i32, i32) {
    %c0_i32 = arith.constant 0 : i32
    %c0_i32_0 = arith.constant 0 : i32
    %c0_i32_1 = arith.constant 0 : i32
    return %c0_i32, %c0_i32_0 : i32, i32
  }
  func.func @transform_7(%arg0: i32) -> (i32, i32) {
    %c0_i32 = arith.constant 0 : i32
    %c0_i32_0 = arith.constant 0 : i32
    %c0_i32_1 = arith.constant 0 : i32
    return %c0_i32, %c0_i32_0 : i32, i32
  }
  func.func @transform_8(%arg0: i32) -> (i32, i32) {
    %c0_i32 = arith.constant 0 : i32
    %c0_i32_0 = arith.constant 0 : i32
    %c0_i32_1 = arith.constant 0 : i32
    return %c0_i32, %c0_i32_0 : i32, i32
  }
  func.func @transform_9(%arg0: i32) -> (i32, i32) {
    %c0_i32 = arith.constant 0 : i32
    %c0_i32_0 = arith.constant 0 : i32
    return %arg0, %c0_i32 : i32, i32
  }
}

</mosaic_0001>

<llo_original>
// kernel: tpu_custom_call.1
$region0: #{tpu_custom_call.1}
  #allocation0 [shape = 'u32[]', space=smem, size = 0x4, offset = 0x4, fixed_abs, tag = 'smem constant byte address 0x4 - core index']
  #allocation1 [shape = 'u32[144,128]{1,0:T(1,128)}', space=vmem, size = 0x12000, scoped, tag = 'internal scratch']
  %s0 = inlined_call_operand.hbm [shape: f32[16,16], index: 0, kind: input, shape index: {}]
  %s1 = inlined_call_operand.hbm [shape: f32[16,32], index: 1, kind: input, shape index: {}]
  %s2 = inlined_call_operand.hbm [shape: bf16[16,128], index: 2, kind: input, shape index: {}]
  %s3 = inlined_call_operand.hbm [shape: bf16[32,128], index: 3, kind: input, shape index: {}]
  %s4 = inlined_call_operand.vmem [shape: f32[1,128], index: 4, kind: input, shape index: {}]
  %s5 = inlined_call_operand.hbm [shape: bf16[128,128], index: 5, kind: input, shape index: {}]
  %s6 = inlined_call_operand.vmem [shape: f32[1,128], index: 6, kind: input, shape index: {}]
  %s7 = inlined_call_operand.hbm [shape: bf16[128,128], index: 7, kind: input, shape index: {}]
  %s8 = inlined_call_operand.vmem [shape: f32[1,128], index: 8, kind: input, shape index: {}]
  %s9 = inlined_call_operand.hbm [shape: bf16[16,128], index: 9, kind: output, shape index: {}]
  %s10 = sld [smem:[#allocation0]]
  $region70: #{tpu_custom_call.1} parent=0
    _
  %s12 = ssub.s32 1, %s10
  %s13 = scalar_select 0, %s12, %s10
  $region1: #{tpu_custom_call.1} parent=0
    #allocation2 [shape = 'u8[8192]{0}', space=vmem, size = 0x2000, scoped, tag = 'input window, operand 0, single buffered']
    #allocation3 [shape = 's32[1]{0}', space=sflag, size = 0x4, scoped, tag = 'scoped memory for tpu_custom_call.1']
    #allocation4 [shape = 's32[1]{0}', space=sflag, size = 0x4, scoped, tag = 'scoped memory for tpu_custom_call.1']
    #allocation5 [shape = 'u8[8192]{0}', space=vmem, size = 0x2000, scoped, tag = 'input window, operand 1, single buffered']
    #allocation6 [shape = 's32[1]{0}', space=sflag, size = 0x4, scoped, tag = 'scoped memory for tpu_custom_call.1']
    #allocation7 [shape = 'u8[4096]{0}', space=vmem, size = 0x1000, scoped, tag = 'input window, operand 2, single buffered']
    #allocation8 [shape = 'u8[8192]{0}', space=vmem, size = 0x2000, scoped, tag = 'input window, operand 3, single buffered']
    #allocation9 [shape = 's32[1]{0}', space=sflag, size = 0x4, scoped, tag = 'scoped memory for tpu_custom_call.1']
    #allocation10 [shape = 'u8[32768]{0}', space=vmem, size = 0x8000, scoped, tag = 'input window, operand 5, single buffered']
    #allocation11 [shape = 'u8[32768]{0}', space=vmem, size = 0x8000, scoped, tag = 'input window, operand 7, single buffered']
    #allocation12 [shape = 's32[1]{0}', space=sflag, size = 0x4, scoped, tag = 'scoped memory for tpu_custom_call.1']
    #allocation13 [shape = 'u8[4096]{0}', space=vmem, size = 0x1000, scoped, tag = 'output window, operand 0, single buffered']
    %14 = vsyncpa [#allocation3], 0
    %15 = vsyncpa [#allocation6], 0
    %16 = vsyncpa [#allocation9], 0
    %17 = vsyncpa [#allocation12], 0
    %18 = vsyncpa [#allocation4], 0
    // Predicated region
    $region2: #{tpu_custom_call.1} parent=1 // pred_check
      _
    $region3: #{tpu_custom_call.1} parent=1 // pred_check_branch
      %20 = sbr.rel (0) target = $region5
    $region4: #{tpu_custom_call.1} parent=1 // pred_region
      %s22 = ssub.s32 256, 256
      %23 = vsyncadd [#allocation3], %s22
      %s24 = sshll.u32 [#allocation2], 4
      %s25 = int_to_ptr.vmem [resolvable:$true] %s24
      %30 = dma.hbm_to_vmem [thread:$0]  %s0, 256, %s25, [#allocation3], 128, 128, 8
    $region5: #{tpu_custom_call.1} parent=1 // pred_fallthru
      _
    // Predicated region
    $region6: #{tpu_custom_call.1} parent=1 // pred_check
      _
    $region7: #{tpu_custom_call.1} parent=1 // pred_check_branch
      %32 = sbr.rel (0) target = $region9
    $region8: #{tpu_custom_call.1} parent=1 // pred_region
      %s34 = ssub.s32 256, 256
      %35 = vsyncadd [#allocation6], %s34
      %s36 = sshll.u32 [#allocation5], 4
      %s37 = int_to_ptr.vmem [resolvable:$true] %s36
      %42 = dma.hbm_to_vmem [thread:$0]  %s1, 256, %s37, [#allocation6], 128, 128, 8
    $region9: #{tpu_custom_call.1} parent=1 // pred_fallthru
      _
    // Predicated region
    $region10: #{tpu_custom_call.1} parent=1 // pred_check
      _
    $region11: #{tpu_custom_call.1} parent=1 // pred_check_branch
      %44 = sbr.rel (0) target = $region13
    $region12: #{tpu_custom_call.1} parent=1 // pred_region
      %s46 = ssub.s32 128, 128
      %47 = vsyncadd [#allocation6], %s46
      %s48 = sshll.u32 [#allocation7], 4
      %s49 = int_to_ptr.vmem [resolvable:$true] %s48
      %54 = dma.hbm_to_vmem [thread:$0]  %s2, 128, %s49, [#allocation6], 64, 64, 4
    $region13: #{tpu_custom_call.1} parent=1 // pred_fallthru
      _
    // Predicated region
    $region14: #{tpu_custom_call.1} parent=1 // pred_check
      _
    $region15: #{tpu_custom_call.1} parent=1 // pred_check_branch
      %56 = sbr.rel (0) target = $region17
    $region16: #{tpu_custom_call.1} parent=1 // pred_region
      %s58 = ssub.s32 256, 256
      %59 = vsyncadd [#allocation9], %s58
      %s60 = sshll.u32 [#allocation8], 4
      %s61 = int_to_ptr.vmem [resolvable:$true] %s60
      %66 = dma.hbm_to_vmem [thread:$0]  %s3, 256, %s61, [#allocation9], 64, 64, 4
    $region17: #{tpu_custom_call.1} parent=1 // pred_fallthru
      _
    // Predicated region
    $region18: #{tpu_custom_call.1} parent=1 // pred_check
      _
    $region19: #{tpu_custom_call.1} parent=1 // pred_check_branch
      %68 = sbr.rel (0) target = $region21
    $region20: #{tpu_custom_call.1} parent=1 // pred_region
      _
    $region21: #{tpu_custom_call.1} parent=1 // pred_fallthru
      _
    // Predicated region
    $region22: #{tpu_custom_call.1} parent=1 // pred_check
      _
    $region23: #{tpu_custom_call.1} parent=1 // pred_check_branch
      %70 = sbr.rel (0) target = $region25
    $region24: #{tpu_custom_call.1} parent=1 // pred_region
      %s72 = ssub.s32 1024, 1024
      %73 = vsyncadd [#allocation9], %s72
      %s74 = sshll.u32 [#allocation10], 4
      %s75 = int_to_ptr.vmem [resolvable:$true] %s74
      %80 = dma.hbm_to_vmem [thread:$0]  %s5, 1024, %s75, [#allocation9], 64, 64, 4
    $region25: #{tpu_custom_call.1} parent=1 // pred_fallthru
      _
    // Predicated region
    $region26: #{tpu_custom_call.1} parent=1 // pred_check
      _
    $region27: #{tpu_custom_call.1} parent=1 // pred_check_branch
      %82 = sbr.rel (0) target = $region29
    $region28: #{tpu_custom_call.1} parent=1 // pred_region
      _
    $region29: #{tpu_custom_call.1} parent=1 // pred_fallthru
      _
    // Predicated region
    $region30: #{tpu_custom_call.1} parent=1 // pred_check
      _
    $region31: #{tpu_custom_call.1} parent=1 // pred_check_branch
      %84 = sbr.rel (0) target = $region33
    $region32: #{tpu_custom_call.1} parent=1 // pred_region
      %s86 = ssub.s32 1024, 1024
      %87 = vsyncadd [#allocation12], %s86
      %s88 = sshll.u32 [#allocation11], 4
      %s89 = int_to_ptr.vmem [resolvable:$true] %s88
      %94 = dma.hbm_to_vmem [thread:$0]  %s7, 1024, %s89, [#allocation12], 64, 64, 4
    $region33: #{tpu_custom_call.1} parent=1 // pred_fallthru
      _
    // Predicated region
    $region34: #{tpu_custom_call.1} parent=1 // pred_check
      _
    $region35: #{tpu_custom_call.1} parent=1 // pred_check_branch
      %96 = sbr.rel (0) target = $region37
    $region36: #{tpu_custom_call.1} parent=1 // pred_region
      _
    $region37: #{tpu_custom_call.1} parent=1 // pred_fallthru
      _
    // Predicated region
    $region38: #{tpu_custom_call.1} parent=1 // pred_check
      _
    $region39: #{tpu_custom_call.1} parent=1 // pred_check_branch
      %98 = sbr.rel (0) target = $region41
    $region40: #{tpu_custom_call.1} parent=1 // pred_region
      %99 = dma.done [#allocation3], 256
    $region41: #{tpu_custom_call.1} parent=1 // pred_fallthru
      _
    // Predicated region
    $region42: #{tpu_custom_call.1} parent=1 // pred_check
      _
    $region43: #{tpu_custom_call.1} parent=1 // pred_check_branch
      %101 = sbr.rel (0) target = $region45
    $region44: #{tpu_custom_call.1} parent=1 // pred_region
      %102 = dma.done [#allocation6], 256
    $region45: #{tpu_custom_call.1} parent=1 // pred_fallthru
      _
    // Predicated region
    $region46: #{tpu_custom_call.1} parent=1 // pred_check
      _
    $region47: #{tpu_custom_call.1} parent=1 // pred_check_branch
      %104 = sbr.rel (0) target = $region49
    $region48: #{tpu_custom_call.1} parent=1 // pred_region
      %105 = dma.done [#allocation6], 128
    $region49: #{tpu_custom_call.1} parent=1 // pred_fallthru
      _
    // Predicated region
    $region50: #{tpu_custom_call.1} parent=1 // pred_check
      _
    $region51: #{tpu_custom_call.1} parent=1 // pred_check_branch
      %107 = sbr.rel (0) target = $region53
    $region52: #{tpu_custom_call.1} parent=1 // pred_region
      %108 = dma.done [#allocation9], 256
    $region53: #{tpu_custom_call.1} parent=1 // pred_fallthru
      _
    // Predicated region
    $region54: #{tpu_custom_call.1} parent=1 // pred_check
      _
    $region55: #{tpu_custom_call.1} parent=1 // pred_check_branch
      %110 = sbr.rel (0) target = $region57
    $region56: #{tpu_custom_call.1} parent=1 // pred_region
      %111 = dma.done [#allocation9], 1024
    $region57: #{tpu_custom_call.1} parent=1 // pred_fallthru
      _
    // Predicated region
    $region58: #{tpu_custom_call.1} parent=1 // pred_check
      _
    $region59: #{tpu_custom_call.1} parent=1 // pred_check_branch
      %113 = sbr.rel (0) target = $region61
    $region60: #{tpu_custom_call.1} parent=1 // pred_region
      %114 = dma.done [#allocation12], 1024
    $region61: #{tpu_custom_call.1} parent=1 // pred_fallthru
      _
    %v116 = vld [vmem:[#allocation7] sm:$0xf]
    %v117 = vld [vmem:[#allocation7 + $0x4] sm:$0xf]
    %v118 = vld [vmem:[#allocation8] sm:$0xf]
    %v119 = vld [vmem:[#allocation8 + $0x4] sm:$0xf]
    %v120 = vld [vmem:[#allocation8 + $0x8] sm:$0xf]
    %v121 = vld [vmem:[#allocation8 + $0xc] sm:$0xf]
    %v122 = vld [vmem:[%s4] sm:$0x1]
    %v123 = vld [vmem:[#allocation10] sm:$0xf]
    %v124 = vld [vmem:[#allocation10 + $0x4] sm:$0xf]
    %v125 = vld [vmem:[#allocation10 + $0x8] sm:$0xf]
    %v126 = vld [vmem:[#allocation10 + $0xc] sm:$0xf]
    %v127 = vld [vmem:[#allocation10 + $0x10] sm:$0xf]
    %v128 = vld [vmem:[#allocation10 + $0x14] sm:$0xf]
    %v129 = vld [vmem:[#allocation10 + $0x18] sm:$0xf]
    %v130 = vld [vmem:[#allocation10 + $0x1c] sm:$0xf]
    %v131 = vld [vmem:[#allocation10 + $0x20] sm:$0xf]
    %v132 = vld [vmem:[#allocation10 + $0x24] sm:$0xf]
    %v133 = vld [vmem:[#allocation10 + $0x28] sm:$0xf]
    %v134 = vld [vmem:[#allocation10 + $0x2c] sm:$0xf]
    %v135 = vld [vmem:[#allocation10 + $0x30] sm:$0xf]
    %v136 = vld [vmem:[#allocation10 + $0x34] sm:$0xf]
    %v137 = vld [vmem:[#allocation10 + $0x38] sm:$0xf]
    %v138 = vld [vmem:[#allocation10 + $0x3c] sm:$0xf]
    %v139 = vld [vmem:[%s6] sm:$0x1]
    %v140 = vld [vmem:[#allocation11] sm:$0xf]
    %v141 = vld [vmem:[#allocation11 + $0x4] sm:$0xf]
    %v142 = vld [vmem:[#allocation11 + $0x8] sm:$0xf]
    %v143 = vld [vmem:[#allocation11 + $0xc] sm:$0xf]
    %v144 = vld [vmem:[#allocation11 + $0x10] sm:$0xf]
    %v145 = vld [vmem:[#allocation11 + $0x14] sm:$0xf]
    %v146 = vld [vmem:[#allocation11 + $0x18] sm:$0xf]
    %v147 = vld [vmem:[#allocation11 + $0x1c] sm:$0xf]
    %v148 = vld [vmem:[#allocation11 + $0x20] sm:$0xf]
    %v149 = vld [vmem:[#allocation11 + $0x24] sm:$0xf]
    %v150 = vld [vmem:[#allocation11 + $0x28] sm:$0xf]
    %v151 = vld [vmem:[#allocation11 + $0x2c] sm:$0xf]
    %v152 = vld [vmem:[#allocation11 + $0x30] sm:$0xf]
    %v153 = vld [vmem:[#allocation11 + $0x34] sm:$0xf]
    %v154 = vld [vmem:[#allocation11 + $0x38] sm:$0xf]
    %v155 = vld [vmem:[#allocation11 + $0x3c] sm:$0xf]
    %v156 = vld [vmem:[%s8] sm:$0x1]
    %v157 = vld [vmem:[#allocation2] sm:$0xff]
    %v158 = vld [vmem:[#allocation2 + $0x8] sm:$0xff]
    %v159 = vpack.c.bf16 %v158, %v157
    %v160 = vld [vmem:[#allocation5] sm:$0xff]
    %v161 = vld [vmem:[#allocation5 + $0x8] sm:$0xff]
    %v162 = vpack.c.bf16 %v161, %v160
    %v167 = vunpack.c.l.b16 %v118
    %v168 = vunpack.c.l.b16 %v119
    %v169 = vunpack.c.l.b16 %v120
    %v170 = vunpack.c.l.b16 %v121
    %v171 = vpack.c.b16 %v168, %v167
    %v172 = vpack.c.b16 %v170, %v169
    %vm175 = vcmask 261120
    %v177 = vsel %vm175, %v162, 0
    %179 = vmatprep.subr.bf16.mxu0 0
    %180 = vmatpush1.bf16.msra.mxu0 %v171
    %181 = vmatprep.subr.bf16.mxu0 0
    %182 = vmatpush1.bf16.msra.mxu0 %v172
    %183 = vmatprep.subr.bf16.mxu0 0
    %184 = vmatpush1.bf16.msra.mxu0 0
    %185 = vmatprep.subr.bf16.mxu0 0
    %186 = vmatpush1.bf16.msra.mxu0 0
    %187 = vmatprep.subr.bf16.mxu0 0
    %188 = vmatpush1.bf16.msra.mxu0 0
    %189 = vmatprep.subr.bf16.mxu0 0
    %190 = vmatpush1.bf16.msra.mxu0 0
    %191 = vmatprep.subr.bf16.mxu0 0
    %192 = vmatpush1.bf16.msra.mxu0 0
    %193 = vmatprep.subr.bf16.mxu0 0
    %194 = vmatpush1.bf16.msra.mxu0 0
    %195 = vmatprep.subr.bf16.mxu0 0
    %196 = vmatpush1.bf16.msra.mxu0 0
    %197 = vmatprep.subr.bf16.mxu0 0
    %198 = vmatpush1.bf16.msra.mxu0 0
    %199 = vmatprep.subr.bf16.mxu0 0
    %200 = vmatpush1.bf16.msra.mxu0 0
    %201 = vmatprep.subr.bf16.mxu0 0
    %202 = vmatpush1.bf16.msra.mxu0 0
    %203 = vmatprep.subr.bf16.mxu0 0
    %204 = vmatpush1.bf16.msra.mxu0 0
    %205 = vmatprep.subr.bf16.mxu0 0
    %206 = vmatpush1.bf16.msra.mxu0 0
    %207 = vmatprep.subr.bf16.mxu0 0
    %208 = vmatpush1.bf16.msra.mxu0 0
    %209 = vmatprep.subr.bf16.mxu0 0
    %210 = vmatpush1.bf16.msra.mxu0 0
    %211 = vmatprep.mubr.bf16.mxu0 0
    %212 = vmatmul.mubr.bf16.gmra.mrb[0].mxu0 %v177
    %v213 = vpop.f32.mrb[0].mxu0
    %v214 = vadd.f32 0.0, %v213
    %v215 = vpop.f32.mrb[0].mxu0
    %v216 = vpop.f32.mrb[0].mxu0
    %v217 = vadd.f32 0.0, %v216
    %v218 = vpop.f32.mrb[0].mxu0
    %219 = vdwg.mxu0
    %v222 = vunpack.c.l.b16 %v116
    %v223 = vunpack.c.l.b16 %v117
    %v224 = vpack.c.b16 %v223, %v222
    %vm226 = vcmask 130048
    %v228 = vsel %vm226, %v159, 0
    %230 = vmatprep.subr.bf16.mxu0 0
    %231 = vmatpush1.bf16.msra.mxu0 %v224
    %232 = vmatprep.subr.bf16.mxu0 0
    %233 = vmatpush1.bf16.msra.mxu0 0
    %234 = vmatprep.subr.bf16.mxu0 0
    %235 = vmatpush1.bf16.msra.mxu0 0
    %236 = vmatprep.subr.bf16.mxu0 0
    %237 = vmatpush1.bf16.msra.mxu0 0
    %238 = vmatprep.subr.bf16.mxu0 0
    %239 = vmatpush1.bf16.msra.mxu0 0
    %240 = vmatprep.subr.bf16.mxu0 0
    %241 = vmatpush1.bf16.msra.mxu0 0
    %242 = vmatprep.subr.bf16.mxu0 0
    %243 = vmatpush1.bf16.msra.mxu0 0
    %244 = vmatprep.subr.bf16.mxu0 0
    %245 = vmatpush1.bf16.msra.mxu0 0
    %246 = vmatprep.subr.bf16.mxu0 0
    %247 = vmatpush1.bf16.msra.mxu0 0
    %248 = vmatprep.subr.bf16.mxu0 0
    %249 = vmatpush1.bf16.msra.mxu0 0
    %250 = vmatprep.subr.bf16.mxu0 0
    %251 = vmatpush1.bf16.msra.mxu0 0
    %252 = vmatprep.subr.bf16.mxu0 0
    %253 = vmatpush1.bf16.msra.mxu0 0
    %254 = vmatprep.subr.bf16.mxu0 0
    %255 = vmatpush1.bf16.msra.mxu0 0
    %256 = vmatprep.subr.bf16.mxu0 0
    %257 = vmatpush1.bf16.msra.mxu0 0
    %258 = vmatprep.subr.bf16.mxu0 0
    %259 = vmatpush1.bf16.msra.mxu0 0
    %260 = vmatprep.subr.bf16.mxu0 0
    %261 = vmatpush1.bf16.msra.mxu0 0
    %262 = vmatprep.mubr.bf16.mxu0 0
    %263 = vmatmul.mubr.bf16.gmra.mrb[0].mxu0 %v228
    %v264 = vpop.f32.mrb[0].mxu0
    %v265 = vadd.f32 %v214, %v264
    %v266 = vpop.f32.mrb[0].mxu0
    %v267 = vpop.f32.mrb[0].mxu0
    %v268 = vadd.f32 %v217, %v267
    %v269 = vpop.f32.mrb[0].mxu0
    %270 = vdwg.mxu0
    %v272 = vlaneseq
    %v273 = vshrl.u32 %v272, 7
    %v274 = vsub.s32 0, %v273
    %v275 = vrot.slane %v122, %v274
    %v277 = vadd.f32 %v265, %v275
    %v278 = vadd.f32 %v268, %v275
    %v279 = vmax.f32 %v277, 0.0
    %v280 = vmax.f32 %v278, 0.0
    %v281 = vpack.c.bf16 %v280, %v279
    %v283 = vlaneseq
    %v284 = vshrl.u32 %v283, 7
    %v285 = vsub.s32 0, %v284
    %v286 = vrot.slane %v139, %v285
    %v304 = vunpack.c.l.b16 %v123
    %v305 = vunpack.c.l.b16 %v124
    %v306 = vunpack.c.l.b16 %v125
    %v307 = vunpack.c.l.b16 %v126
    %v308 = vunpack.c.l.b16 %v127
    %v309 = vunpack.c.l.b16 %v128
    %v310 = vunpack.c.l.b16 %v129
    %v311 = vunpack.c.l.b16 %v130
    %v312 = vunpack.c.l.b16 %v131
    %v313 = vunpack.c.l.b16 %v132
    %v314 = vunpack.c.l.b16 %v133
    %v315 = vunpack.c.l.b16 %v134
    %v316 = vunpack.c.l.b16 %v135
    %v317 = vunpack.c.l.b16 %v136
    %v318 = vunpack.c.l.b16 %v137
    %v319 = vunpack.c.l.b16 %v138
    %v320 = vpack.c.b16 %v305, %v304
    %v321 = vpack.c.b16 %v307, %v306
    %v322 = vpack.c.b16 %v309, %v308
    %v323 = vpack.c.b16 %v311, %v310
    %v324 = vpack.c.b16 %v313, %v312
    %v325 = vpack.c.b16 %v315, %v314
    %v326 = vpack.c.b16 %v317, %v316
    %v327 = vpack.c.b16 %v319, %v318
    %336 = vmatprep.subr.bf16.mxu0 0
    %337 = vmatpush1.bf16.msra.mxu0 %v320
    %338 = vmatprep.subr.bf16.mxu0 0
    %339 = vmatpush1.bf16.msra.mxu0 %v321
    %340 = vmatprep.subr.bf16.mxu0 0
    %341 = vmatpush1.bf16.msra.mxu0 %v322
    %342 = vmatprep.subr.bf16.mxu0 0
    %343 = vmatpush1.bf16.msra.mxu0 %v323
    %344 = vmatprep.subr.bf16.mxu0 0
    %345 = vmatpush1.bf16.msra.mxu0 %v324
    %346 = vmatprep.subr.bf16.mxu0 0
    %347 = vmatpush1.bf16.msra.mxu0 %v325
    %348 = vmatprep.subr.bf16.mxu0 0
    %349 = vmatpush1.bf16.msra.mxu0 %v326
    %350 = vmatprep.subr.bf16.mxu0 0
    %351 = vmatpush1.bf16.msra.mxu0 %v327
    %352 = vmatprep.subr.bf16.mxu0 0
    %353 = vmatpush1.bf16.msra.mxu0 0
    %354 = vmatprep.subr.bf16.mxu0 0
    %355 = vmatpush1.bf16.msra.mxu0 0
    %356 = vmatprep.subr.bf16.mxu0 0
    %357 = vmatpush1.bf16.msra.mxu0 0
    %358 = vmatprep.subr.bf16.mxu0 0
    %359 = vmatpush1.bf16.msra.mxu0 0
    %360 = vmatprep.subr.bf16.mxu0 0
    %361 = vmatpush1.bf16.msra.mxu0 0
    %362 = vmatprep.subr.bf16.mxu0 0
    %363 = vmatpush1.bf16.msra.mxu0 0
    %364 = vmatprep.subr.bf16.mxu0 0
    %365 = vmatpush1.bf16.msra.mxu0 0
    %366 = vmatprep.subr.bf16.mxu0 0
    %367 = vmatpush1.bf16.msra.mxu0 0
    %368 = vmatprep.mubr.bf16.mxu0 0
    %369 = vmatmul.mubr.bf16.gmra.mrb[0].mxu0 %v281
    %v370 = vpop.f32.mrb[0].mxu0
    %v371 = vadd.f32 %v286, %v370
    %v372 = vpop.f32.mrb[0].mxu0
    %v373 = vpop.f32.mrb[0].mxu0
    %v374 = vadd.f32 %v286, %v373
    %v375 = vpop.f32.mrb[0].mxu0
    %376 = vdwg.mxu0
    %v377 = vmax.f32 %v371, 0.0
    %v378 = vmax.f32 %v374, 0.0
    %v379 = vunpack.c.l.bf16 %v281
    %v380 = vunpack.c.h.bf16 %v281
    %v381 = vadd.f32 %v377, %v379
    %v382 = vadd.f32 %v378, %v380
    %v383 = vpack.c.bf16 %v382, %v381
    %v385 = vlaneseq
    %v386 = vshrl.u32 %v385, 7
    %v387 = vsub.s32 0, %v386
    %v388 = vrot.slane %v156, %v387
    %v406 = vunpack.c.l.b16 %v140
    %v407 = vunpack.c.l.b16 %v141
    %v408 = vunpack.c.l.b16 %v142
    %v409 = vunpack.c.l.b16 %v143
    %v410 = vunpack.c.l.b16 %v144
    %v411 = vunpack.c.l.b16 %v145
    %v412 = vunpack.c.l.b16 %v146
    %v413 = vunpack.c.l.b16 %v147
    %v414 = vunpack.c.l.b16 %v148
    %v415 = vunpack.c.l.b16 %v149
    %v416 = vunpack.c.l.b16 %v150
    %v417 = vunpack.c.l.b16 %v151
    %v418 = vunpack.c.l.b16 %v152
    %v419 = vunpack.c.l.b16 %v153
    %v420 = vunpack.c.l.b16 %v154
    %v421 = vunpack.c.l.b16 %v155
    %v422 = vpack.c.b16 %v407, %v406
    %v423 = vpack.c.b16 %v409, %v408
    %v424 = vpack.c.b16 %v411, %v410
    %v425 = vpack.c.b16 %v413, %v412
    %v426 = vpack.c.b16 %v415, %v414
    %v427 = vpack.c.b16 %v417, %v416
    %v428 = vpack.c.b16 %v419, %v418
    %v429 = vpack.c.b16 %v421, %v420
    %438 = vmatprep.subr.bf16.mxu0 0
    %439 = vmatpush1.bf16.msra.mxu0 %v422
    %440 = vmatprep.subr.bf16.mxu0 0
    %441 = vmatpush1.bf16.msra.mxu0 %v423
    %442 = vmatprep.subr.bf16.mxu0 0
    %443 = vmatpush1.bf16.msra.mxu0 %v424
    %444 = vmatprep.subr.bf16.mxu0 0
    %445 = vmatpush1.bf16.msra.mxu0 %v425
    %446 = vmatprep.subr.bf16.mxu0 0
    %447 = vmatpush1.bf16.msra.mxu0 %v426
    %448 = vmatprep.subr.bf16.mxu0 0
    %449 = vmatpush1.bf16.msra.mxu0 %v427
    %450 = vmatprep.subr.bf16.mxu0 0
    %451 = vmatpush1.bf16.msra.mxu0 %v428
    %452 = vmatprep.subr.bf16.mxu0 0
    %453 = vmatpush1.bf16.msra.mxu0 %v429
    %454 = vmatprep.subr.bf16.mxu0 0
    %455 = vmatpush1.bf16.msra.mxu0 0
    %456 = vmatprep.subr.bf16.mxu0 0
    %457 = vmatpush1.bf16.msra.mxu0 0
    %458 = vmatprep.subr.bf16.mxu0 0
    %459 = vmatpush1.bf16.msra.mxu0 0
    %460 = vmatprep.subr.bf16.mxu0 0
    %461 = vmatpush1.bf16.msra.mxu0 0
    %462 = vmatprep.subr.bf16.mxu0 0
    %463 = vmatpush1.bf16.msra.mxu0 0
    %464 = vmatprep.subr.bf16.mxu0 0
    %465 = vmatpush1.bf16.msra.mxu0 0
    %466 = vmatprep.subr.bf16.mxu0 0
    %467 = vmatpush1.bf16.msra.mxu0 0
    %468 = vmatprep.subr.bf16.mxu0 0
    %469 = vmatpush1.bf16.msra.mxu0 0
    %470 = vmatprep.mubr.bf16.mxu0 0
    %471 = vmatmul.mubr.bf16.gmra.mrb[0].mxu0 %v383
    %v472 = vpop.f32.mrb[0].mxu0
    %v473 = vadd.f32 %v388, %v472
    %v474 = vpop.f32.mrb[0].mxu0
    %v475 = vpop.f32.mrb[0].mxu0
    %v476 = vadd.f32 %v388, %v475
    %v477 = vpop.f32.mrb[0].mxu0
    %478 = vdwg.mxu0
    %v479 = vmax.f32 %v473, 0.0
    %v480 = vmax.f32 %v476, 0.0
    %v481 = vpack.c.bf16 %v480, %v479
    %v483 = vunpack.c.l.b16 %v481
    %v484 = vunpack.c.h.b16 %v481
    %v485 = vpack.c.b16 %v483, %v483
    %v486 = vpack.c.b16 %v484, %v484
    %489 = vst [vmem:[#allocation13] sm:$0xf] %v485
    %490 = vst [vmem:[#allocation13 + $0x4] sm:$0xf] %v486
    // Predicated region
    $region62: #{tpu_custom_call.1} parent=1 // pred_check
      _
    $region63: #{tpu_custom_call.1} parent=1 // pred_check_branch
      %492 = sbr.rel (0) target = $region65
    $region64: #{tpu_custom_call.1} parent=1 // pred_region
      %s494 = ssub.s32 128, 128
      %495 = vsyncadd [#allocation4], %s494
      %s496 = sshll.u32 [#allocation13], 4
      %s497 = int_to_ptr.vmem [resolvable:$true] %s496
      %502 = dma.vmem_to_hbm [thread:$0]  %s497, 128, %s9, [#allocation4], 64, 64, 4
    $region65: #{tpu_custom_call.1} parent=1 // pred_fallthru
      _
    // Predicated region
    $region66: #{tpu_custom_call.1} parent=1 // pred_check
      _
    $region67: #{tpu_custom_call.1} parent=1 // pred_check_branch
      %504 = sbr.rel (0) target = $region69
    $region68: #{tpu_custom_call.1} parent=1 // pred_region
      %505 = dma.done [#allocation4], 128
    $region69: #{tpu_custom_call.1} parent=1 // pred_fallthru
      _
    %506 = vsyncpa [#allocation3], 1
    %507 = vsyncpa [#allocation6], 1
    %508 = vsyncpa [#allocation9], 1
    %509 = vsyncpa [#allocation12], 1
    %510 = vsyncpa [#allocation4], 1

</llo_original>
